<compile_context>
chip_gen: v5e
topology: v5e:2x2
jax: 0.10.0
libtpu: 0.0.40
codegen_flags: <defaults>
</compile_context>

<pallas_src>
import functools

import jax
import jax.numpy as jnp
from jax.experimental import pallas as pl
from jax.experimental.pallas import tpu as pltpu

SMOOTHING = 0.1
_TARGET_BLOCK_BYTES = 2 * 1024 * 1024   # ~2 MiB logit tile per grid step
_MAX_TILE_ROWS = 1024


def _label_smooth_ce_kernel(pred_ref, label_ref, out_ref, *, smoothing, n_valid):
    # pred_ref: [TN, C] (f32/bf16), label_ref: [TN, 1] i32, out_ref: [TN, 1] f32.
    pred = pred_ref[...].astype(jnp.float32)          # cast in-kernel (bf16 friendly)
    labels = label_ref[...]                           # [TN, 1] i32
    tn, c = pred.shape

    # Row-wise logsumexp: lse_i = m_i + log(sum_j exp(pred_ij - m_i))  (EUP + XLU)
    m = jnp.max(pred, axis=1, keepdims=True)           # [TN, 1]
    e = jnp.exp(pred - m)                               # [TN, C]  EUP
    lse = m + jnp.log(jnp.sum(e, axis=1, keepdims=True))

    # pred[i, label_i] via masked row-reduce (no gather on TPU), plus row sum.
    col_ids = jax.lax.broadcasted_iota(jnp.int32, (tn, c), 1)
    pred_at_label = jnp.sum(jnp.where(col_ids == labels, pred, 0.0),
                            axis=1, keepdims=True)      # [TN, 1]
    row_sum = jnp.sum(pred, axis=1, keepdims=True)       # [TN, 1]

    # loss_i = lse_i - (1-s)*pred[i,label_i] - (s/C)*sum_j pred[i,j]
    loss = lse - (1.0 - smoothing) * pred_at_label - (smoothing / c) * row_sum

    # Zero padded rows so the wrapper can sum the whole padded output.
    row_ids = (pl.program_id(0) * tn
               + jax.lax.broadcasted_iota(jnp.int32, (tn, 1), 0))
    out_ref[...] = jnp.where(row_ids < n_valid, loss, 0.0)


def _pick_tile_rows(n, c, itemsize):
    rows = _TARGET_BLOCK_BYTES // max(1, c * itemsize)
    rows = max(8, min(_MAX_TILE_ROWS, int(rows)))
    rows = (rows // 8) * 8
    n8 = ((n + 7) // 8) * 8
    return max(8, min(rows, n8))


def label_smooth_ce_loss(pred, label, smoothing=SMOOTHING, tile_rows=None):
    """pred: [N, C] float32/bfloat16 logits, label: [N] int -> scalar f32 loss."""
    n, c = pred.shape
    label2d = label.astype(jnp.int32).reshape(n, 1)

    if tile_rows is None:
        tn = _pick_tile_rows(n, c, pred.dtype.itemsize)
    else:
        tn = max(8, (int(tile_rows) // 8) * 8)
        tn = min(tn, ((n + 7) // 8) * 8)

    num_tiles = pl.cdiv(n, tn)
    n_pad = num_tiles * tn

    if n_pad != n:
        pred = jnp.pad(pred, ((0, n_pad - n), (0, 0)))
        label2d = jnp.pad(label2d, ((0, n_pad - n), (0, 0)))

    kernel = functools.partial(_label_smooth_ce_kernel,
                               smoothing=float(smoothing), n_valid=n)

    cost = pl.CostEstimate(
        flops=6 * n_pad * c,
        transcendentals=n_pad * c,
        bytes_accessed=n_pad * c * pred.dtype.itemsize + 2 * n_pad * 4,
    )

    per_row = pl.pallas_call(
        kernel,
        out_shape=jax.ShapeDtypeStruct((n_pad, 1), jnp.float32),
        grid_spec=pltpu.PrefetchScalarGridSpec(
            num_scalar_prefetch=0,
            grid=(num_tiles,),
            in_specs=[
                pl.BlockSpec((tn, c), lambda i: (i, 0)),
                pl.BlockSpec((tn, 1), lambda i: (i, 0)),
            ],
            out_specs=pl.BlockSpec((tn, 1), lambda i: (i, 0)),
        ),
        compiler_params=pltpu.CompilerParams(
            dimension_semantics=("parallel",),
        ),
        cost_estimate=cost,
    )(pred, label2d)

    # Padded rows are exactly 0, so a plain sum over n_pad rows is correct.
    return jnp.sum(per_row) / jnp.float32(n)


def _reference(pred, label, smoothing=SMOOTHING):
    # Pure-JAX reference mirroring the PyTorch module exactly.
    p = jax.nn.softmax(pred.astype(jnp.float32), axis=1)
    one_hot = jax.nn.one_hot(label, pred.shape[1], dtype=jnp.float32)
    smoothed = (1.0 - smoothing) * one_hot + smoothing / pred.shape[1]
    loss = -jnp.log(p) * smoothed
    return jnp.mean(jnp.sum(loss, axis=1))


if __name__ == "__main__":
    key = jax.random.PRNGKey(0)
    kp, kl = jax.random.split(key)

    # Primary small case (matches the module's [N, C] logits + [N] labels).
    N, C = 8, 32
    pred = jax.random.normal(kp, (N, C), dtype=jnp.float32)
    label = jax.random.randint(kl, (N,), 0, C, dtype=jnp.int32)
    loss = label_smooth_ce_loss(pred, label)
    jax.block_until_ready(loss)
    ref = _reference(pred, label)
    assert jnp.allclose(loss, ref, rtol=1e-5, atol=1e-5), (loss, ref)

    # Ragged batch + explicit small tile: exercises padded-last-tile masking.
    kp2, kl2 = jax.random.split(jax.random.PRNGKey(1))
    N2, C2 = 20, 32
    pred2 = jax.random.normal(kp2, (N2, C2), dtype=jnp.float32)
    label2 = jax.random.randint(kl2, (N2,), 0, C2, dtype=jnp.int32)
    loss2 = label_smooth_ce_loss(pred2, label2, tile_rows=16)
    jax.block_until_ready(loss2)
    ref2 = _reference(pred2, label2)
    assert jnp.allclose(loss2, ref2, rtol=1e-5, atol=1e-5), (loss2, ref2)

    # bf16 logits: in-kernel f32 cast, HBM traffic halves.
    pred3 = pred2.astype(jnp.bfloat16)
    loss3 = label_smooth_ce_loss(pred3, label2)
    jax.block_until_ready(loss3)
    ref3 = _reference(pred3.astype(jnp.float32), label2)
    assert jnp.allclose(loss3, ref3, rtol=2e-2, atol=2e-2), (loss3, ref3)

    print("KERNEL_OK")
</pallas_src>

<mosaic_0001>
module attributes {stable_mosaic.version = 11 : i64} {
  func.func @_label_smooth_ce_kernel(%arg0: i32, %arg1: memref<8x32xf32, #tpu.memory_space<vmem>>, %arg2: memref<8x1xi32, #tpu.memory_space<vmem>>, %arg3: memref<8x1xf32, #tpu.memory_space<vmem>>) attributes {dimension_semantics = [#tpu.dimension_semantics<parallel>], iteration_bounds = array<i64: 1>, scalar_prefetch = 0 : i64, scratch_operands = 0 : i64, tpu.core_type = #tpu.core_type<tc>, window_params = [{transform_indices = @transform_0, window_bounds = array<i64: 8, 32>}, {transform_indices = @transform_1, window_bounds = array<i64: 8, 1>}, {transform_indices = @transform_2, window_bounds = array<i64: 8, 1>}]} {
    %c0 = arith.constant 0 : index
    %c0_0 = arith.constant 0 : index
    %0 = vector.load %arg1[%c0, %c0_0] : memref<8x32xf32, #tpu.memory_space<vmem>>, vector<8x32xf32>
    %c0_1 = arith.constant 0 : index
    %c0_2 = arith.constant 0 : index
    %1 = vector.load %arg2[%c0_1, %c0_2] : memref<8x1xi32, #tpu.memory_space<vmem>>, vector<8x1xi32>
    %cst = arith.constant dense<0xFF800000> : vector<8xf32>
    %2 = vector.multi_reduction <maximumf>, %0, %cst [1] : vector<8x32xf32> to vector<8xf32>
    %3 = vector.shape_cast %2 : vector<8xf32> to vector<8x1xf32>
    %4 = vector.broadcast %3 : vector<8x1xf32> to vector<8x32xf32>
    %5 = arith.subf %0, %4 : vector<8x32xf32>
    %6 = math.exp %5 : vector<8x32xf32>
    %cst_3 = arith.constant dense<0.000000e+00> : vector<8xf32>
    %7 = vector.multi_reduction <add>, %6, %cst_3 [1] : vector<8x32xf32> to vector<8xf32>
    %8 = vector.shape_cast %7 : vector<8xf32> to vector<8x1xf32>
    %9 = math.log %8 : vector<8x1xf32>
    %10 = arith.addf %3, %9 : vector<8x1xf32>
    %11 = tpu.iota {dimensions = array<i32: 1>} : vector<8x32xi32>
    %12 = vector.broadcast %1 : vector<8x1xi32> to vector<8x32xi32>
    %13 = arith.cmpi eq, %11, %12 : vector<8x32xi32>
    %cst_4 = arith.constant 0.000000e+00 : f32
    %14 = vector.broadcast %cst_4 : f32 to vector<8x32xf32>
    %15 = arith.select %13, %0, %14 : vector<8x32xi1>, vector<8x32xf32>
    %cst_5 = arith.constant dense<0.000000e+00> : vector<8xf32>
    %16 = vector.multi_reduction <add>, %15, %cst_5 [1] : vector<8x32xf32> to vector<8xf32>
    %17 = vector.shape_cast %16 : vector<8xf32> to vector<8x1xf32>
    %cst_6 = arith.constant dense<0.000000e+00> : vector<8xf32>
    %18 = vector.multi_reduction <add>, %0, %cst_6 [1] : vector<8x32xf32> to vector<8xf32>
    %19 = vector.shape_cast %18 : vector<8xf32> to vector<8x1xf32>
    %cst_7 = arith.constant 0.899999976 : f32
    %20 = vector.broadcast %cst_7 : f32 to vector<8x1xf32>
    %21 = arith.mulf %20, %17 : vector<8x1xf32>
    %22 = arith.subf %10, %21 : vector<8x1xf32>
    %cst_8 = arith.constant 3.125000e-03 : f32
    %23 = vector.broadcast %cst_8 : f32 to vector<8x1xf32>
    %24 = arith.mulf %23, %19 : vector<8x1xf32>
    %25 = arith.subf %22, %24 : vector<8x1xf32>
    %c8_i32 = arith.constant 8 : i32
    %26 = arith.muli %arg0, %c8_i32 : i32
    %27 = tpu.iota {dimensions = array<i32: 0>} : vector<8x1xi32>
    %28 = vector.broadcast %26 : i32 to vector<8x1xi32>
    %29 = arith.addi %28, %27 : vector<8x1xi32>
    %c8_i32_9 = arith.constant 8 : i32
    %30 = vector.broadcast %c8_i32_9 : i32 to vector<8x1xi32>
    %31 = arith.cmpi slt, %29, %30 : vector<8x1xi32>
    %cst_10 = arith.constant 0.000000e+00 : f32
    %32 = vector.broadcast %cst_10 : f32 to vector<8x1xf32>
    %33 = arith.select %31, %25, %32 : vector<8x1xi1>, vector<8x1xf32>
    %c0_11 = arith.constant 0 : index
    %c0_12 = arith.constant 0 : index
    %34 = vector.load %arg3[%c0_11, %c0_12] : memref<8x1xf32, #tpu.memory_space<vmem>>, vector<8x1xf32>
    tpu.vector_store %arg3[%c0_11, %c0_12], %33 {strides = array<i32>} : memref<8x1xf32, #tpu.memory_space<vmem>>, vector<8x1xf32>,
    return
  }
  func.func @transform_0(%arg0: i32) -> (i32, i32) {
    %c0_i32 = arith.constant 0 : i32
    %c0_i32_0 = arith.constant 0 : i32
    return %arg0, %c0_i32 : i32, i32
  }
  func.func @transform_1(%arg0: i32) -> (i32, i32) {
    %c0_i32 = arith.constant 0 : i32
    %c0_i32_0 = arith.constant 0 : i32
    return %arg0, %c0_i32 : i32, i32
  }
  func.func @transform_2(%arg0: i32) -> (i32, i32) {
    %c0_i32 = arith.constant 0 : i32
    %c0_i32_0 = arith.constant 0 : i32
    return %arg0, %c0_i32 : i32, i32
  }
}

</mosaic_0001>

<llo_original>
// kernel: tpu_custom_call.1
$region0: #{tpu_custom_call.1}
  #allocation0 [shape = 'u32[]', space=smem, size = 0x4, offset = 0x4, fixed_abs, tag = 'smem constant byte address 0x4 - core index']
  #allocation1 [shape = 'u32[72,128]{1,0:T(1,128)}', space=vmem, size = 0x9000, scoped, tag = 'internal scratch']
  %s0 = inlined_call_operand.vmem [shape: f32[8,32], index: 0, kind: input, shape index: {}]
  %s1 = inlined_call_operand.vmem [shape: s32[8,1], index: 1, kind: input, shape index: {}]
  %s2 = inlined_call_operand.vmem [shape: f32[8,1], index: 2, kind: output, shape index: {}]
  %s3 = sld [smem:[#allocation0]]
  $region18: #{tpu_custom_call.1} parent=0
    _
  %s5 = ssub.s32 1, %s3
  %s6 = scalar_select 0, %s5, %s3
  // Predicated region
  $region2: #{tpu_custom_call.1} parent=0 // pred_check
    _
  $region3: #{tpu_custom_call.1} parent=0 // pred_check_branch
    %8 = sbr.rel (0) target = $region5
  $region4: #{tpu_custom_call.1} parent=0 // pred_region
    _
  $region5: #{tpu_custom_call.1} parent=0 // pred_fallthru
    _
  // Predicated region
  $region6: #{tpu_custom_call.1} parent=0 // pred_check
    _
  $region7: #{tpu_custom_call.1} parent=0 // pred_check_branch
    %10 = sbr.rel (0) target = $region9
  $region8: #{tpu_custom_call.1} parent=0 // pred_region
    _
  $region9: #{tpu_custom_call.1} parent=0 // pred_fallthru
    _
  %v11 = vld [vmem:[%s0] sm:$0xff]
  %v12 = vld [vmem:[%s1] sm:$0xff]
  %vm13 = vcmask 261120
  %v14 = vsel %vm13, %v11, -inf
  %15 = vmax.xlane.f32.xlu0 %v14
  %v16 = vpop.xlane.xlu0 %15
  %v17 = vsub.f32 %v11, %v16
  %v18 = vmul.f32 %v17, 1.442695
  %v19 = vpow.pop %v18
  %v20 = vsel %vm13, %v19, 0.0
  %21 = vadd.xlane.f32.xlu0 %v20
  %v22 = vpop.xlane.xlu0 %21
  %v23 = vlog2.pop %v22
  %v24 = vmul.f32 %v23, 0.6931472
  %v25 = vadd.f32 %v16, %v24
  %v26 = vlaneseq
  %v27 = vand.u32 %v26, 127
  %28 = vset.pattern.permute.xlu0 0
  %29 = vperm.xlu0 %28, %v12
  %v30 = vpop.permute.xlu0 %29
  %vm31 = vcmp.eq.s32.totalorder %v27, %v30
  %v32 = vsel %vm31, %v11, 0.0
  %v33 = vsel %vm13, %v32, 0.0
  %34 = vadd.xlane.f32.xlu0 %v33
  %v35 = vpop.xlane.xlu0 %34
  %v36 = vsel %vm13, %v11, 0.0
  %37 = vadd.xlane.f32.xlu0 %v36
  %v38 = vpop.xlane.xlu0 %37
  %v39 = vmul.f32 %v35, 0.9
  %v40 = vsub.f32 %v25, %v39
  %v41 = vmul.f32 %v38, 0.003125
  %v42 = vsub.f32 %v40, %v41
  %s43 = smul.u32 0, 8
  %v44 = vlaneseq
  %v45 = vshrl.u32 %v44, 7
  %v46 = vstv %s43
  %v47 = vadd.s32 %v46, %v45
  %vm48 = vcmp.lt.s32.totalorder %v47, 8
  %v49 = vsel %vm48, %v42, 0.0
  %vm50 = vcmask 7168
  %51 = vst.msk [vmem:[%s2] sm:$0xff] %vm50, %v49
  // Predicated region
  $region10: #{tpu_custom_call.1} parent=0 // pred_check
    _
  $region11: #{tpu_custom_call.1} parent=0 // pred_check_branch
    %53 = sbr.rel (0) target = $region13
  $region12: #{tpu_custom_call.1} parent=0 // pred_region
    _
  $region13: #{tpu_custom_call.1} parent=0 // pred_fallthru
    _
  // Predicated region
  $region14: #{tpu_custom_call.1} parent=0 // pred_check
    _
  $region15: #{tpu_custom_call.1} parent=0 // pred_check_branch
    %55 = sbr.rel (0) target = $region17
  $region16: #{tpu_custom_call.1} parent=0 // pred_region
    _
  $region17: #{tpu_custom_call.1} parent=0 // pred_fallthru
    _

</llo_original>
